<compile_context>
chip_gen: v6e
topology: v6e:2x2x1
jax: 0.10.0
libtpu: 0.0.40
codegen_flags: <defaults>
</compile_context>

<pallas_src>
import functools

import jax
import jax.numpy as jnp
from jax.experimental import pallas as pl
from jax.experimental.pallas import tpu as pltpu


def _importance_kernel(a_ref, o_ref, *, wpr_iter, use_vpu):
    # a_ref: (Gb, N, N) block of per-(b,h) attention matrices, native dtype.
    # o_ref: (Gb, N) f32 block of per-(b,h) squared scores s^2.
    Gb, N, _ = a_ref.shape
    a = a_ref[...]
    inv_n = 1.0 / N

    if wpr_iter == 0:
        r = jnp.full((Gb, N), inv_n, dtype=jnp.float32)
    else:
        # Iteration 1: s0 is uniform 1/N, so A^T s0 is the column mean of A.
        # XLU sublane reduce with f32 accumulation -- keeps the MXU free.
        r = jnp.sum(a, axis=1, dtype=jnp.float32) * inv_n          # (Gb, N) f32
        if use_vpu:
            # VPU path (bf16 inputs / large wpr_iter): r stays f32 end-to-end.
            #   r_next[g, k] = sum_j a[g, j, k] * r[g, j]
            # = broadcast-multiply (VPU) + sublane reduce (XLU).
            for _ in range(wpr_iter - 1):
                r = jnp.sum(a * r[:, :, None], axis=1)
        else:
            # MXU path (f32 inputs, small wpr_iter): Gb independent (1,N)x(N,N)
            # GEMVs; operands and accumulator are both f32, so no per-step
            # reduced-precision round-trip of r.  r is expanded to (Gb,1,N)
            # only at the dot boundary and squeezed right back.
            for _ in range(wpr_iter - 1):
                r = jnp.einsum(
                    "gij,gjk->gik", r[:, None, :], a,
                    preferred_element_type=jnp.float32,
                )[:, 0, :]

    o_ref[...] = (r * r).astype(o_ref.dtype)                        # s^2


def _round_up(x, m):
    return -(-x // m) * m


def _vmem_capacity_bytes():
    """Physical per-core VMEM; conservative fallback (v7x = 64 MiB) on failure."""
    try:
        info = pltpu.get_tpu_info()
        for name in ("vmem_capacity_bytes", "vmem_size_bytes", "vmem_bytes"):
            v = getattr(info, name, None)
            if v:
                return int(v)
    except Exception:  # pragma: no cover - any failure -> conservative default
        pass
    return 64 << 20


def _pick_block_g(G, max_rows):
    """Block size along the folded B*H axis.

    Multiple of 8 (so the (block_g, N) output block satisfies the (8,128)
    layout rule), at most `max_rows`, preferring an EVEN number of grid steps
    so the "parallel" axis balances across v7x's two TensorCores."""
    if G <= 8:
        return G                                    # single full block
    max_rows = max(8, min(G, (max_rows // 8) * 8))
    if max_rows >= G:
        # Everything fits in one block; still split into ~2 steps so the
        # pipeline overlaps DMA with compute and both v7x cores get work.
        bg = min(G, _round_up(-(-G // 2), 8))
        if bg >= G:
            return G
        max_rows = bg
    bg = max_rows
    while bg >= 8:
        if (-(-G // bg)) % 2 == 0:                  # even number of grid steps
            return bg
        bg -= 8
    return max_rows


def zero_t_pruen_importance(attn_weights, wpr_iter, *, block_g=None):
    """attn_weights: (B, H, N, N) (f32 or bf16) -> importance (B, N-1) f32."""
    B, H, N, N2 = attn_weights.shape
    assert N == N2, "attention matrix must be square"
    G = B * H

    # Fold batch and heads into one blocked axis (contiguous -> free reshape).
    a = attn_weights.reshape(G, N, N)
    dtype = a.dtype
    itemsize = jnp.dtype(dtype).itemsize
    sublane = {4: 8, 2: 16, 1: 32}.get(itemsize, 8)

    # Padded VMEM footprints (what a tile really costs, not raw element count).
    pad_rows = _round_up(N, sublane)
    pad_lane = _round_up(N, 128)
    per_g_in = pad_rows * pad_lane * itemsize        # one (N,N) slab, input dtype
    per_g_f32 = _round_up(N, 8) * pad_lane * 4       # one (N,N) slab, f32
    out_row = pad_lane * 4                           # one (1,N) f32 output row

    use_vpu = (dtype != jnp.float32) or (wpr_iter > 8)

    # Per-row VMEM cost: double-buffered input + double-buffered output rows
    # + (VPU path only) ~2 live full-size f32 temporaries (promoted operand /
    # broadcast product materialised by the mul+reduce).
    inter_per_row = 2 * per_g_f32 if use_vpu else 0
    per_row_cost = 2 * per_g_in + 2 * out_row + inter_per_row

    vmem_cap = _vmem_capacity_bytes()
    cap = vmem_cap - (8 << 20)                       # compiler headroom
    fixed_slack = 4 << 20

    if block_g is None:
        budget_per_in_buf = min(32 << 20, int(cap / 2.5))   # ~32 MiB v5e/v6e, ~20 MiB v7x
        max_rows = max(1, min((cap - fixed_slack) // per_row_cost,
                              budget_per_in_buf // max(per_g_in, 1)))
        block_g = _pick_block_g(G, max_rows)
    block_g = max(1, min(block_g, G))
    grid_g = pl.cdiv(G, block_g)

    needed = block_g * per_row_cost + fixed_slack
    vmem_limit = int(min(cap, max(needed, 16 << 20)))

    kernel = functools.partial(_importance_kernel, wpr_iter=wpr_iter,
                               use_vpu=use_vpu)

    s_sq = pl.pallas_call(
        kernel,
        out_shape=jax.ShapeDtypeStruct((G, N), jnp.float32),
        grid_spec=pltpu.PrefetchScalarGridSpec(
            num_scalar_prefetch=0,
            grid=(grid_g,),
            in_specs=[pl.BlockSpec((block_g, N, N), lambda g: (g, 0, 0))],
            out_specs=pl.BlockSpec((block_g, N), lambda g: (g, 0)),
        ),
        compiler_params=pltpu.CompilerParams(
            dimension_semantics=("parallel",),
            vmem_limit_bytes=vmem_limit,
        ),
    )(a)  # native dtype in; the kernel handles precision itself

    # Tiny epilogue (O(B*H*N) f32): drop column 0, sum squares over heads, sqrt.
    s_sq = s_sq.reshape(B, H, N)
    return jnp.sqrt(jnp.sum(s_sq[..., 1:], axis=1))


def _reference(attn_weights, wpr_iter):
    """Pure-JAX reference mirroring the PyTorch forward exactly."""
    B, H, N, _ = attn_weights.shape
    s = jnp.full((B, H, N, 1), 1.0 / N, dtype=jnp.float32)
    a_t = jnp.swapaxes(attn_weights.astype(jnp.float32), -1, -2)
    for _ in range(wpr_iter):
        s = jnp.matmul(a_t, s)
    s = jnp.squeeze(s, -1)                        # (B, H, N)
    s = s[..., 1:]                                # (B, H, N-1)
    return jnp.sqrt(jnp.sum(s ** 2, axis=-2))     # (B, N-1)


if __name__ == "__main__":
    key = jax.random.PRNGKey(0)
    wpr_iter = 3

    # Case 1: tiny ViT-ish shape; G = B*H = 8 -> one full block, grid=(1,).
    B, H, N = 2, 4, 16
    logits = jax.random.normal(key, (B, H, N, N), dtype=jnp.float32)
    attn = jax.nn.softmax(logits, axis=-1)        # row-stochastic, like real attention
    out = jax.block_until_ready(zero_t_pruen_importance(attn, wpr_iter))
    ref = _reference(attn, wpr_iter)
    assert out.shape == (B, N - 1), out.shape
    assert jnp.allclose(out, ref, atol=1e-5, rtol=1e-5), (
        f"case1 max abs err = {jnp.max(jnp.abs(out - ref))}"
    )

    # Case 2: G = 32 -> block_g = 16, grid = (2,) (even steps, f32 MXU path).
    B2, H2, N2 = 4, 8, 32
    logits2 = jax.random.normal(jax.random.PRNGKey(1), (B2, H2, N2, N2),
                                dtype=jnp.float32)
    attn2 = jax.nn.softmax(logits2, axis=-1)
    out2 = jax.block_until_ready(zero_t_pruen_importance(attn2, wpr_iter))
    ref2 = _reference(attn2, wpr_iter)
    assert out2.shape == (B2, N2 - 1), out2.shape
    assert jnp.allclose(out2, ref2, atol=1e-5, rtol=1e-5), (
        f"case2 max abs err = {jnp.max(jnp.abs(out2 - ref2))}"
    )

    # Case 3: bf16 input -> VPU path (r stays f32; no per-step bf16 rounding).
    # Looser tolerance: the pure-JAX reference runs at XLA's default matmul
    # precision while the kernel does the iteration in full f32.
    B3, H3, N3 = 3, 2, 16
    logits3 = jax.random.normal(jax.random.PRNGKey(2), (B3, H3, N3, N3),
                                dtype=jnp.float32)
    attn3 = jax.nn.softmax(logits3, axis=-1).astype(jnp.bfloat16)
    out3 = jax.block_until_ready(zero_t_pruen_importance(attn3, 4))
    ref3 = _reference(attn3, 4)
    assert out3.shape == (B3, N3 - 1), out3.shape
    assert jnp.allclose(out3, ref3, atol=1e-3, rtol=1e-3), (
        f"case3 max abs err = {jnp.max(jnp.abs(out3 - ref3))}"
    )

    print("KERNEL_OK")
</pallas_src>

<mosaic_0001>
module attributes {stable_mosaic.version = 11 : i64} {
  func.func @_importance_kernel(%arg0: i32, %arg1: memref<8x16x16xf32, #tpu.memory_space<vmem>>, %arg2: memref<8x16xf32, #tpu.memory_space<vmem>>) attributes {dimension_semantics = [#tpu.dimension_semantics<parallel>], iteration_bounds = array<i64: 1>, scalar_prefetch = 0 : i64, scratch_operands = 0 : i64, tpu.core_type = #tpu.core_type<tc>, window_params = [{transform_indices = @transform_0, window_bounds = array<i64: 8, 16, 16>}, {transform_indices = @transform_1, window_bounds = array<i64: 8, 16>}]} {
    %c0 = arith.constant 0 : index
    %c0_0 = arith.constant 0 : index
    %c0_1 = arith.constant 0 : index
    %0 = vector.load %arg1[%c0, %c0_0, %c0_1] : memref<8x16x16xf32, #tpu.memory_space<vmem>>, vector<8x16x16xf32>
    %cst = arith.constant dense<0.000000e+00> : vector<8x16xf32>
    %1 = vector.multi_reduction <add>, %0, %cst [1] : vector<8x16x16xf32> to vector<8x16xf32>
    %cst_2 = arith.constant 6.250000e-02 : f32
    %2 = vector.broadcast %cst_2 : f32 to vector<8x16xf32>
    %3 = arith.mulf %1, %2 : vector<8x16xf32>
    %4 = vector.shape_cast %3 : vector<8x16xf32> to vector<8x1x16xf32>
    "tpu.trace_start"() <{level = 10 : i32, message = "gij,gjk->gik"}> : () -> ()
    %cst_3 = arith.constant dense<0.000000e+00> : vector<8x1x16xf32>
    %5 = tpu.matmul %4, %0, %cst_3 {dimension_numbers = #tpu.dot_dimension_numbers<[2], [1], [1], [2], [0, 0, 0, 1, 1, 2], [0], [0]>} : vector<8x1x16xf32>, vector<8x16x16xf32>, vector<8x1x16xf32> -> vector<8x1x16xf32>
    "tpu.trace_stop"() : () -> ()
    %6 = vector.shape_cast %5 : vector<8x1x16xf32> to vector<8x16xf32>
    %7 = vector.shape_cast %6 : vector<8x16xf32> to vector<8x1x16xf32>
    "tpu.trace_start"() <{level = 10 : i32, message = "gij,gjk->gik"}> : () -> ()
    %cst_4 = arith.constant dense<0.000000e+00> : vector<8x1x16xf32>
    %8 = tpu.matmul %7, %0, %cst_4 {dimension_numbers = #tpu.dot_dimension_numbers<[2], [1], [1], [2], [0, 0, 0, 1, 1, 2], [0], [0]>} : vector<8x1x16xf32>, vector<8x16x16xf32>, vector<8x1x16xf32> -> vector<8x1x16xf32>
    "tpu.trace_stop"() : () -> ()
    %9 = vector.shape_cast %8 : vector<8x1x16xf32> to vector<8x16xf32>
    %10 = arith.mulf %9, %9 : vector<8x16xf32>
    %c0_5 = arith.constant 0 : index
    %c0_6 = arith.constant 0 : index
    %11 = vector.load %arg2[%c0_5, %c0_6] : memref<8x16xf32, #tpu.memory_space<vmem>>, vector<8x16xf32>
    tpu.vector_store %arg2[%c0_5, %c0_6], %10 {strides = array<i32>} : memref<8x16xf32, #tpu.memory_space<vmem>>, vector<8x16xf32>,
    return
  }
  func.func @transform_0(%arg0: i32) -> (i32, i32, i32) {
    %c0_i32 = arith.constant 0 : i32
    %c0_i32_0 = arith.constant 0 : i32
    %c0_i32_1 = arith.constant 0 : i32
    return %arg0, %c0_i32, %c0_i32_0 : i32, i32, i32
  }
  func.func @transform_1(%arg0: i32) -> (i32, i32) {
    %c0_i32 = arith.constant 0 : i32
    %c0_i32_0 = arith.constant 0 : i32
    return %arg0, %c0_i32 : i32, i32
  }
}

</mosaic_0001>

<llo_original>
// kernel: tpu_custom_call.1
$region0: #{tpu_custom_call.1}
  #allocation0 [shape = 'u32[]', space=smem, size = 0x4, offset = 0x4, fixed_abs, tag = 'smem constant byte address 0x4 - core index']
  #allocation1 [shape = 'u32[144,128]{1,0:T(1,128)}', space=vmem, size = 0x12000, scoped, tag = 'internal scratch']
  %s0 = inlined_call_operand.hbm [shape: f32[8,16,16], index: 0, kind: input, shape index: {}]
  %s1 = inlined_call_operand.hbm [shape: f32[8,16], index: 1, kind: output, shape index: {}]
  %s2 = sld [smem:[#allocation0]]
  $region18: #{tpu_custom_call.1} parent=0
    _
  %s4 = ssub.s32 1, %s2
  %s5 = scalar_select 0, %s4, %s2
  $region1: #{tpu_custom_call.1} parent=0
    #allocation2 [shape = 'u8[65536]{0}', space=vmem, size = 0x10000, scoped, tag = 'input window, operand 0, single buffered']
    #allocation3 [shape = 's32[1]{0}', space=sflag, size = 0x4, scoped, tag = 'scoped memory for tpu_custom_call.1']
    #allocation4 [shape = 's32[1]{0}', space=sflag, size = 0x4, scoped, tag = 'scoped memory for tpu_custom_call.1']
    #allocation5 [shape = 'u8[4096]{0}', space=vmem, size = 0x1000, scoped, tag = 'output window, operand 0, single buffered']
    %6 = vsyncpa [#allocation3], 0
    %7 = vsyncpa [#allocation4], 0
    // Predicated region
    $region2: #{tpu_custom_call.1} parent=1 // pred_check
      _
    $region3: #{tpu_custom_call.1} parent=1 // pred_check_branch
      %9 = sbr.rel (0) target = $region5
    $region4: #{tpu_custom_call.1} parent=1 // pred_region
      %s11 = ssub.s32 2048, 2048
      %12 = vsyncadd [#allocation3], %s11
      %s13 = sshll.u32 [#allocation2], 4
      %s14 = int_to_ptr.vmem [resolvable:$true] %s13
      %19 = dma.hbm_to_vmem [thread:$0]  %s0, 2048, %s14, [#allocation3], 128, 128, 8
    $region5: #{tpu_custom_call.1} parent=1 // pred_fallthru
      _
    // Predicated region
    $region6: #{tpu_custom_call.1} parent=1 // pred_check
      _
    $region7: #{tpu_custom_call.1} parent=1 // pred_check_branch
      %21 = sbr.rel (0) target = $region9
    $region8: #{tpu_custom_call.1} parent=1 // pred_region
      %22 = dma.done [#allocation3], 2048
    $region9: #{tpu_custom_call.1} parent=1 // pred_fallthru
      _
    %v23 = vld [vmem:[#allocation2] sm:$0xff]
    %v24 = vld [vmem:[#allocation2 + $0x8] sm:$0xff]
    %v25 = vld [vmem:[#allocation2 + $0x10] sm:$0xff]
    %v26 = vld [vmem:[#allocation2 + $0x18] sm:$0xff]
    %v27 = vld [vmem:[#allocation2 + $0x20] sm:$0xff]
    %v28 = vld [vmem:[#allocation2 + $0x28] sm:$0xff]
    %v29 = vld [vmem:[#allocation2 + $0x30] sm:$0xff]
    %v30 = vld [vmem:[#allocation2 + $0x38] sm:$0xff]
    %v31 = vld [vmem:[#allocation2 + $0x40] sm:$0xff]
    %v32 = vld [vmem:[#allocation2 + $0x48] sm:$0xff]
    %v33 = vld [vmem:[#allocation2 + $0x50] sm:$0xff]
    %v34 = vld [vmem:[#allocation2 + $0x58] sm:$0xff]
    %v35 = vld [vmem:[#allocation2 + $0x60] sm:$0xff]
    %v36 = vld [vmem:[#allocation2 + $0x68] sm:$0xff]
    %v37 = vld [vmem:[#allocation2 + $0x70] sm:$0xff]
    %v38 = vld [vmem:[#allocation2 + $0x78] sm:$0xff]
    %vm39 = vcmask 130048
    %v40 = vsel %vm39, %v23, 0.0
    %v41 = vsel %vm39, %v24, 0.0
    %v42 = vadd.f32 %v40, %v41
    %v43 = vrot.slane %v42, 4
    %v44 = vadd.f32 %v42, %v43
    %v45 = vrot.slane %v44, 2
    %v46 = vadd.f32 %v44, %v45
    %v47 = vrot.slane %v46, 1
    %v48 = vadd.f32 %v46, %v47
    %v49 = vsel %vm39, %v25, 0.0
    %v50 = vsel %vm39, %v26, 0.0
    %v51 = vadd.f32 %v49, %v50
    %v52 = vrot.slane %v51, 4
    %v53 = vadd.f32 %v51, %v52
    %v54 = vrot.slane %v53, 2
    %v55 = vadd.f32 %v53, %v54
    %v56 = vrot.slane %v55, 1
    %v57 = vadd.f32 %v55, %v56
    %v58 = vsel %vm39, %v27, 0.0
    %v59 = vsel %vm39, %v28, 0.0
    %v60 = vadd.f32 %v58, %v59
    %v61 = vrot.slane %v60, 4
    %v62 = vadd.f32 %v60, %v61
    %v63 = vrot.slane %v62, 2
    %v64 = vadd.f32 %v62, %v63
    %v65 = vrot.slane %v64, 1
    %v66 = vadd.f32 %v64, %v65
    %v67 = vsel %vm39, %v29, 0.0
    %v68 = vsel %vm39, %v30, 0.0
    %v69 = vadd.f32 %v67, %v68
    %v70 = vrot.slane %v69, 4
    %v71 = vadd.f32 %v69, %v70
    %v72 = vrot.slane %v71, 2
    %v73 = vadd.f32 %v71, %v72
    %v74 = vrot.slane %v73, 1
    %v75 = vadd.f32 %v73, %v74
    %v76 = vsel %vm39, %v31, 0.0
    %v77 = vsel %vm39, %v32, 0.0
    %v78 = vadd.f32 %v76, %v77
    %v79 = vrot.slane %v78, 4
    %v80 = vadd.f32 %v78, %v79
    %v81 = vrot.slane %v80, 2
    %v82 = vadd.f32 %v80, %v81
    %v83 = vrot.slane %v82, 1
    %v84 = vadd.f32 %v82, %v83
    %v85 = vsel %vm39, %v33, 0.0
    %v86 = vsel %vm39, %v34, 0.0
    %v87 = vadd.f32 %v85, %v86
    %v88 = vrot.slane %v87, 4
    %v89 = vadd.f32 %v87, %v88
    %v90 = vrot.slane %v89, 2
    %v91 = vadd.f32 %v89, %v90
    %v92 = vrot.slane %v91, 1
    %v93 = vadd.f32 %v91, %v92
    %v94 = vsel %vm39, %v35, 0.0
    %v95 = vsel %vm39, %v36, 0.0
    %v96 = vadd.f32 %v94, %v95
    %v97 = vrot.slane %v96, 4
    %v98 = vadd.f32 %v96, %v97
    %v99 = vrot.slane %v98, 2
    %v100 = vadd.f32 %v98, %v99
    %v101 = vrot.slane %v100, 1
    %v102 = vadd.f32 %v100, %v101
    %v103 = vsel %vm39, %v37, 0.0
    %v104 = vsel %vm39, %v38, 0.0
    %v105 = vadd.f32 %v103, %v104
    %v106 = vrot.slane %v105, 4
    %v107 = vadd.f32 %v105, %v106
    %v108 = vrot.slane %v107, 2
    %v109 = vadd.f32 %v107, %v108
    %v110 = vrot.slane %v109, 1
    %v111 = vadd.f32 %v109, %v110
    %v112 = vmul.f32 %v48, 0.0625
    %v113 = vmul.f32 %v57, 0.0625
    %v114 = vmul.f32 %v66, 0.0625
    %v115 = vmul.f32 %v75, 0.0625
    %v116 = vmul.f32 %v84, 0.0625
    %v117 = vmul.f32 %v93, 0.0625
    %v118 = vmul.f32 %v102, 0.0625
    %v119 = vmul.f32 %v111, 0.0625
    %v121 = vsel %vm39, %v112, 0
    %123 = vmatprep.subr.mxu0 0.0
    %124 = vmatpush1.msra.mxu0 0.0
    %125 = vmatprep.subr.mxu0 0.0
    %126 = vmatpush1.msra.mxu0 0.0
    %127 = vmatprep.subr.mxu0 0.0
    %128 = vmatpush1.msra.mxu0 0.0
    %129 = vmatprep.subr.mxu0 0.0
    %130 = vmatpush1.msra.mxu0 0.0
    %131 = vmatprep.subr.mxu0 0.0
    %132 = vmatpush1.msra.mxu0 0.0
    %133 = vmatprep.subr.mxu0 0.0
    %134 = vmatpush1.msra.mxu0 0.0
    %135 = vmatprep.subr.mxu0 0.0
    %136 = vmatpush1.msra.mxu0 0.0
    %137 = vmatprep.subr.mxu0 0.0
    %138 = vmatpush1.msra.mxu0 0.0
    %139 = vmatprep.subr.mxu0 0.0
    %140 = vmatpush1.msra.mxu0 0.0
    %141 = vmatprep.subr.mxu0 0.0
    %142 = vmatpush1.msra.mxu0 0.0
    %143 = vmatprep.subr.mxu0 0.0
    %144 = vmatpush1.msra.mxu0 0.0
    %145 = vmatprep.subr.mxu0 0.0
    %146 = vmatpush1.msra.mxu0 0.0
    %147 = vmatprep.subr.mxu0 0.0
    %148 = vmatpush1.msra.mxu0 0.0
    %149 = vmatprep.subr.mxu0 0.0
    %150 = vmatpush1.msra.mxu0 0.0
    %151 = vmatprep.subr.mxu0 0.0
    %152 = vmatpush1.msra.mxu0 %v24
    %153 = vmatprep.subr.mxu0 0.0
    %154 = vmatpush1.msra.mxu0 %v23
    %155 = vmatprep.subr.mxu0 0.0
    %156 = vmatpush2.msra.mxu0 0.0
    %157 = vmatprep.subr.mxu0 0.0
    %158 = vmatpush2.msra.mxu0 0.0
    %159 = vmatprep.subr.mxu0 0.0
    %160 = vmatpush2.msra.mxu0 0.0
    %161 = vmatprep.subr.mxu0 0.0
    %162 = vmatpush2.msra.mxu0 0.0
    %163 = vmatprep.subr.mxu0 0.0
    %164 = vmatpush2.msra.mxu0 0.0
    %165 = vmatprep.subr.mxu0 0.0
    %166 = vmatpush2.msra.mxu0 0.0
    %167 = vmatprep.subr.mxu0 0.0
    %168 = vmatpush2.msra.mxu0 0.0
    %169 = vmatprep.subr.mxu0 0.0
    %170 = vmatpush2.msra.mxu0 0.0
    %171 = vmatprep.subr.mxu0 0.0
    %172 = vmatpush2.msra.mxu0 0.0
    %173 = vmatprep.subr.mxu0 0.0
    %174 = vmatpush2.msra.mxu0 0.0
    %175 = vmatprep.subr.mxu0 0.0
    %176 = vmatpush2.msra.mxu0 0.0
    %177 = vmatprep.subr.mxu0 0.0
    %178 = vmatpush2.msra.mxu0 0.0
    %179 = vmatprep.subr.mxu0 0.0
    %180 = vmatpush2.msra.mxu0 0.0
    %181 = vmatprep.subr.mxu0 0.0
    %182 = vmatpush2.msra.mxu0 0.0
    %183 = vmatprep.subr.mxu0 0.0
    %184 = vmatpush2.msra.mxu0 0.0
    %185 = vmatprep.subr.mxu0 0.0
    %186 = vmatpush2.msra.mxu0 0.0
    %187 = vmatprep.mubr.f32.mxu0 0.0
    %188 = vmatmul.mubr.f32.gmra.mxu0 %v121
    %v189 = vpop.f32.mrf.mxu0
    %v190 = vadd.f32 0.0, %v189
    %v191 = vpop.f32.mrf.mxu0
    %192 = vdwg.mxu0
    %v194 = vsel %vm39, %v113, 0
    %196 = vmatprep.subr.mxu0 0.0
    %197 = vmatpush1.msra.mxu0 0.0
    %198 = vmatprep.subr.mxu0 0.0
    %199 = vmatpush1.msra.mxu0 0.0
    %200 = vmatprep.subr.mxu0 0.0
    %201 = vmatpush1.msra.mxu0 0.0
    %202 = vmatprep.subr.mxu0 0.0
    %203 = vmatpush1.msra.mxu0 0.0
    %204 = vmatprep.subr.mxu0 0.0
    %205 = vmatpush1.msra.mxu0 0.0
    %206 = vmatprep.subr.mxu0 0.0
    %207 = vmatpush1.msra.mxu0 0.0
    %208 = vmatprep.subr.mxu0 0.0
    %209 = vmatpush1.msra.mxu0 0.0
    %210 = vmatprep.subr.mxu0 0.0
    %211 = vmatpush1.msra.mxu0 0.0
    %212 = vmatprep.subr.mxu0 0.0
    %213 = vmatpush1.msra.mxu0 0.0
    %214 = vmatprep.subr.mxu0 0.0
    %215 = vmatpush1.msra.mxu0 0.0
    %216 = vmatprep.subr.mxu0 0.0
    %217 = vmatpush1.msra.mxu0 0.0
    %218 = vmatprep.subr.mxu0 0.0
    %219 = vmatpush1.msra.mxu0 0.0
    %220 = vmatprep.subr.mxu0 0.0
    %221 = vmatpush1.msra.mxu0 0.0
    %222 = vmatprep.subr.mxu0 0.0
    %223 = vmatpush1.msra.mxu0 0.0
    %224 = vmatprep.subr.mxu0 0.0
    %225 = vmatpush1.msra.mxu0 %v26
    %226 = vmatprep.subr.mxu0 0.0
    %227 = vmatpush1.msra.mxu0 %v25
    %228 = vmatprep.subr.mxu0 0.0
    %229 = vmatpush2.msra.mxu0 0.0
    %230 = vmatprep.subr.mxu0 0.0
    %231 = vmatpush2.msra.mxu0 0.0
    %232 = vmatprep.subr.mxu0 0.0
    %233 = vmatpush2.msra.mxu0 0.0
    %234 = vmatprep.subr.mxu0 0.0
    %235 = vmatpush2.msra.mxu0 0.0
    %236 = vmatprep.subr.mxu0 0.0
    %237 = vmatpush2.msra.mxu0 0.0
    %238 = vmatprep.subr.mxu0 0.0
    %239 = vmatpush2.msra.mxu0 0.0
    %240 = vmatprep.subr.mxu0 0.0
    %241 = vmatpush2.msra.mxu0 0.0
    %242 = vmatprep.subr.mxu0 0.0
    %243 = vmatpush2.msra.mxu0 0.0
    %244 = vmatprep.subr.mxu0 0.0
    %245 = vmatpush2.msra.mxu0 0.0
    %246 = vmatprep.subr.mxu0 0.0
    %247 = vmatpush2.msra.mxu0 0.0
    %248 = vmatprep.subr.mxu0 0.0
    %249 = vmatpush2.msra.mxu0 0.0
    %250 = vmatprep.subr.mxu0 0.0
    %251 = vmatpush2.msra.mxu0 0.0
    %252 = vmatprep.subr.mxu0 0.0
    %253 = vmatpush2.msra.mxu0 0.0
    %254 = vmatprep.subr.mxu0 0.0
    %255 = vmatpush2.msra.mxu0 0.0
    %256 = vmatprep.subr.mxu0 0.0
    %257 = vmatpush2.msra.mxu0 0.0
    %258 = vmatprep.subr.mxu0 0.0
    %259 = vmatpush2.msra.mxu0 0.0
    %260 = vmatprep.mubr.f32.mxu0 0.0
    %261 = vmatmul.mubr.f32.gmra.mxu0 %v194
    %v262 = vpop.f32.mrf.mxu0
    %v263 = vadd.f32 0.0, %v262
    %v264 = vpop.f32.mrf.mxu0
    %265 = vdwg.mxu0
    %v267 = vsel %vm39, %v114, 0
    %269 = vmatprep.subr.mxu0 0.0
    %270 = vmatpush1.msra.mxu0 0.0
    %271 = vmatprep.subr.mxu0 0.0
    %272 = vmatpush1.msra.mxu0 0.0
    %273 = vmatprep.subr.mxu0 0.0
    %274 = vmatpush1.msra.mxu0 0.0
    %275 = vmatprep.subr.mxu0 0.0
    %276 = vmatpush1.msra.mxu0 0.0
    %277 = vmatprep.subr.mxu0 0.0
    %278 = vmatpush1.msra.mxu0 0.0
    %279 = vmatprep.subr.mxu0 0.0
    %280 = vmatpush1.msra.mxu0 0.0
    %281 = vmatprep.subr.mxu0 0.0
    %282 = vmatpush1.msra.mxu0 0.0
    %283 = vmatprep.subr.mxu0 0.0
    %284 = vmatpush1.msra.mxu0 0.0
    %285 = vmatprep.subr.mxu0 0.0
    %286 = vmatpush1.msra.mxu0 0.0
    %287 = vmatprep.subr.mxu0 0.0
    %288 = vmatpush1.msra.mxu0 0.0
    %289 = vmatprep.subr.mxu0 0.0
    %290 = vmatpush1.msra.mxu0 0.0
    %291 = vmatprep.subr.mxu0 0.0
    %292 = vmatpush1.msra.mxu0 0.0
    %293 = vmatprep.subr.mxu0 0.0
    %294 = vmatpush1.msra.mxu0 0.0
    %295 = vmatprep.subr.mxu0 0.0
    %296 = vmatpush1.msra.mxu0 0.0
    %297 = vmatprep.subr.mxu0 0.0
    %298 = vmatpush1.msra.mxu0 %v28
    %299 = vmatprep.subr.mxu0 0.0
    %300 = vmatpush1.msra.mxu0 %v27
    %301 = vmatprep.subr.mxu0 0.0
    %302 = vmatpush2.msra.mxu0 0.0
    %303 = vmatprep.subr.mxu0 0.0
    %304 = vmatpush2.msra.mxu0 0.0
    %305 = vmatprep.subr.mxu0 0.0
    %306 = vmatpush2.msra.mxu0 0.0
    %307 = vmatprep.subr.mxu0 0.0
    %308 = vmatpush2.msra.mxu0 0.0
    %309 = vmatprep.subr.mxu0 0.0
    %310 = vmatpush2.msra.mxu0 0.0
    %311 = vmatprep.subr.mxu0 0.0
    %312 = vmatpush2.msra.mxu0 0.0
    %313 = vmatprep.subr.mxu0 0.0
    %314 = vmatpush2.msra.mxu0 0.0
    %315 = vmatprep.subr.mxu0 0.0
    %316 = vmatpush2.msra.mxu0 0.0
    %317 = vmatprep.subr.mxu0 0.0
    %318 = vmatpush2.msra.mxu0 0.0
    %319 = vmatprep.subr.mxu0 0.0
    %320 = vmatpush2.msra.mxu0 0.0
    %321 = vmatprep.subr.mxu0 0.0
    %322 = vmatpush2.msra.mxu0 0.0
    %323 = vmatprep.subr.mxu0 0.0
    %324 = vmatpush2.msra.mxu0 0.0
    %325 = vmatprep.subr.mxu0 0.0
    %326 = vmatpush2.msra.mxu0 0.0
    %327 = vmatprep.subr.mxu0 0.0
    %328 = vmatpush2.msra.mxu0 0.0
    %329 = vmatprep.subr.mxu0 0.0
    %330 = vmatpush2.msra.mxu0 0.0
    %331 = vmatprep.subr.mxu0 0.0
    %332 = vmatpush2.msra.mxu0 0.0
    %333 = vmatprep.mubr.f32.mxu0 0.0
    %334 = vmatmul.mubr.f32.gmra.mxu0 %v267
    %v335 = vpop.f32.mrf.mxu0
    %v336 = vadd.f32 0.0, %v335
    %v337 = vpop.f32.mrf.mxu0
    %338 = vdwg.mxu0
    %v340 = vsel %vm39, %v115, 0
    %342 = vmatprep.subr.mxu0 0.0
    %343 = vmatpush1.msra.mxu0 0.0
    %344 = vmatprep.subr.mxu0 0.0
    %345 = vmatpush1.msra.mxu0 0.0
    %346 = vmatprep.subr.mxu0 0.0
    %347 = vmatpush1.msra.mxu0 0.0
    %348 = vmatprep.subr.mxu0 0.0
    %349 = vmatpush1.msra.mxu0 0.0
    %350 = vmatprep.subr.mxu0 0.0
    %351 = vmatpush1.msra.mxu0 0.0
    %352 = vmatprep.subr.mxu0 0.0
    %353 = vmatpush1.msra.mxu0 0.0
    %354 = vmatprep.subr.mxu0 0.0
    %355 = vmatpush1.msra.mxu0 0.0
    %356 = vmatprep.subr.mxu0 0.0
    %357 = vmatpush1.msra.mxu0 0.0
    %358 = vmatprep.subr.mxu0 0.0
    %359 = vmatpush1.msra.mxu0 0.0
    %360 = vmatprep.subr.mxu0 0.0
    %361 = vmatpush1.msra.mxu0 0.0
    %362 = vmatprep.subr.mxu0 0.0
    %363 = vmatpush1.msra.mxu0 0.0
    %364 = vmatprep.subr.mxu0 0.0
    %365 = vmatpush1.msra.mxu0 0.0
    %366 = vmatprep.subr.mxu0 0.0
    %367 = vmatpush1.msra.mxu0 0.0
    %368 = vmatprep.subr.mxu0 0.0
    %369 = vmatpush1.msra.mxu0 0.0
    %370 = vmatprep.subr.mxu0 0.0
    %371 = vmatpush1.msra.mxu0 %v30
    %372 = vmatprep.subr.mxu0 0.0
    %373 = vmatpush1.msra.mxu0 %v29
    %374 = vmatprep.subr.mxu0 0.0
    %375 = vmatpush2.msra.mxu0 0.0
    %376 = vmatprep.subr.mxu0 0.0
    %377 = vmatpush2.msra.mxu0 0.0
    %378 = vmatprep.subr.mxu0 0.0
    %379 = vmatpush2.msra.mxu0 0.0
    %380 = vmatprep.subr.mxu0 0.0
    %381 = vmatpush2.msra.mxu0 0.0
    %382 = vmatprep.subr.mxu0 0.0
    %383 = vmatpush2.msra.mxu0 0.0
    %384 = vmatprep.subr.mxu0 0.0
    %385 = vmatpush2.msra.mxu0 0.0
    %386 = vmatprep.subr.mxu0 0.0
    %387 = vmatpush2.msra.mxu0 0.0
    %388 = vmatprep.subr.mxu0 0.0
    %389 = vmatpush2.msra.mxu0 0.0
    %390 = vmatprep.subr.mxu0 0.0
    %391 = vmatpush2.msra.mxu0 0.0
    %392 = vmatprep.subr.mxu0 0.0
    %393 = vmatpush2.msra.mxu0 0.0
    %394 = vmatprep.subr.mxu0 0.0
    %395 = vmatpush2.msra.mxu0 0.0
    %396 = vmatprep.subr.mxu0 0.0
    %397 = vmatpush2.msra.mxu0 0.0
    %398 = vmatprep.subr.mxu0 0.0
    %399 = vmatpush2.msra.mxu0 0.0
    %400 = vmatprep.subr.mxu0 0.0
    %401 = vmatpush2.msra.mxu0 0.0
    %402 = vmatprep.subr.mxu0 0.0
    %403 = vmatpush2.msra.mxu0 0.0
    %404 = vmatprep.subr.mxu0 0.0
    %405 = vmatpush2.msra.mxu0 0.0
    %406 = vmatprep.mubr.f32.mxu0 0.0
    %407 = vmatmul.mubr.f32.gmra.mxu0 %v340
    %v408 = vpop.f32.mrf.mxu0
    %v409 = vadd.f32 0.0, %v408
    %v410 = vpop.f32.mrf.mxu0
    %411 = vdwg.mxu0
    %v413 = vsel %vm39, %v116, 0
    %415 = vmatprep.subr.mxu0 0.0
    %416 = vmatpush1.msra.mxu0 0.0
    %417 = vmatprep.subr.mxu0 0.0
    %418 = vmatpush1.msra.mxu0 0.0
    %419 = vmatprep.subr.mxu0 0.0
    %420 = vmatpush1.msra.mxu0 0.0
    %421 = vmatprep.subr.mxu0 0.0
    %422 = vmatpush1.msra.mxu0 0.0
    %423 = vmatprep.subr.mxu0 0.0
    %424 = vmatpush1.msra.mxu0 0.0
    %425 = vmatprep.subr.mxu0 0.0
    %426 = vmatpush1.msra.mxu0 0.0
    %427 = vmatprep.subr.mxu0 0.0
    %428 = vmatpush1.msra.mxu0 0.0
    %429 = vmatprep.subr.mxu0 0.0
    %430 = vmatpush1.msra.mxu0 0.0
    %431 = vmatprep.subr.mxu0 0.0
    %432 = vmatpush1.msra.mxu0 0.0
    %433 = vmatprep.subr.mxu0 0.0
    %434 = vmatpush1.msra.mxu0 0.0
    %435 = vmatprep.subr.mxu0 0.0
    %436 = vmatpush1.msra.mxu0 0.0
    %437 = vmatprep.subr.mxu0 0.0
    %438 = vmatpush1.msra.mxu0 0.0
    %439 = vmatprep.subr.mxu0 0.0
    %440 = vmatpush1.msra.mxu0 0.0
    %441 = vmatprep.subr.mxu0 0.0
    %442 = vmatpush1.msra.mxu0 0.0
    %443 = vmatprep.subr.mxu0 0.0
    %444 = vmatpush1.msra.mxu0 %v32
    %445 = vmatprep.subr.mxu0 0.0
    %446 = vmatpush1.msra.mxu0 %v31
    %447 = vmatprep.subr.mxu0 0.0
    %448 = vmatpush2.msra.mxu0 0.0
    %449 = vmatprep.subr.mxu0 0.0
    %450 = vmatpush2.msra.mxu0 0.0
    %451 = vmatprep.subr.mxu0 0.0
    %452 = vmatpush2.msra.mxu0 0.0
    %453 = vmatprep.subr.mxu0 0.0
    %454 = vmatpush2.msra.mxu0 0.0
    %455 = vmatprep.subr.mxu0 0.0
    %456 = vmatpush2.msra.mxu0 0.0
    %457 = vmatprep.subr.mxu0 0.0
    %458 = vmatpush2.msra.mxu0 0.0
    %459 = vmatprep.subr.mxu0 0.0
    %460 = vmatpush2.msra.mxu0 0.0
    %461 = vmatprep.subr.mxu0 0.0
    %462 = vmatpush2.msra.mxu0 0.0
    %463 = vmatprep.subr.mxu0 0.0
    %464 = vmatpush2.msra.mxu0 0.0
    %465 = vmatprep.subr.mxu0 0.0
    %466 = vmatpush2.msra.mxu0 0.0
    %467 = vmatprep.subr.mxu0 0.0
    %468 = vmatpush2.msra.mxu0 0.0
    %469 = vmatprep.subr.mxu0 0.0
    %470 = vmatpush2.msra.mxu0 0.0
    %471 = vmatprep.subr.mxu0 0.0
    %472 = vmatpush2.msra.mxu0 0.0
    %473 = vmatprep.subr.mxu0 0.0
    %474 = vmatpush2.msra.mxu0 0.0
    %475 = vmatprep.subr.mxu0 0.0
    %476 = vmatpush2.msra.mxu0 0.0
    %477 = vmatprep.subr.mxu0 0.0
    %478 = vmatpush2.msra.mxu0 0.0
    %479 = vmatprep.mubr.f32.mxu0 0.0
    %480 = vmatmul.mubr.f32.gmra.mxu0 %v413
    %v481 = vpop.f32.mrf.mxu0
    %v482 = vadd.f32 0.0, %v481
    %v483 = vpop.f32.mrf.mxu0
    %484 = vdwg.mxu0
    %v486 = vsel %vm39, %v117, 0
    %488 = vmatprep.subr.mxu0 0.0
    %489 = vmatpush1.msra.mxu0 0.0
    %490 = vmatprep.subr.mxu0 0.0
    %491 = vmatpush1.msra.mxu0 0.0
    %492 = vmatprep.subr.mxu0 0.0
    %493 = vmatpush1.msra.mxu0 0.0
    %494 = vmatprep.subr.mxu0 0.0
    %495 = vmatpush1.msra.mxu0 0.0
    %496 = vmatprep.subr.mxu0 0.0
    %497 = vmatpush1.msra.mxu0 0.0
    %498 = vmatprep.subr.mxu0 0.0
    %499 = vmatpush1.msra.mxu0 0.0
    %500 = vmatprep.subr.mxu0 0.0
    %501 = vmatpush1.msra.mxu0 0.0
    %502 = vmatprep.subr.mxu0 0.0
    %503 = vmatpush1.msra.mxu0 0.0
    %504 = vmatprep.subr.mxu0 0.0
    %505 = vmatpush1.msra.mxu0 0.0
    %506 = vmatprep.subr.mxu0 0.0
    %507 = vmatpush1.msra.mxu0 0.0
    %508 = vmatprep.subr.mxu0 0.0
    %509 = vmatpush1.msra.mxu0 0.0
    %510 = vmatprep.subr.mxu0 0.0
    %511 = vmatpush1.msra.mxu0 0.0
    %512 = vmatprep.subr.mxu0 0.0
    %513 = vmatpush1.msra.mxu0 0.0
    %514 = vmatprep.subr.mxu0 0.0
    %515 = vmatpush1.msra.mxu0 0.0
    %516 = vmatprep.subr.mxu0 0.0
    %517 = vmatpush1.msra.mxu0 %v34
    %518 = vmatprep.subr.mxu0 0.0
    %519 = vmatpush1.msra.mxu0 %v33
    %520 = vmatprep.subr.mxu0 0.0
    %521 = vmatpush2.msra.mxu0 0.0
    %522 = vmatprep.subr.mxu0 0.0
    %523 = vmatpush2.msra.mxu0 0.0
    %524 = vmatprep.subr.mxu0 0.0
    %525 = vmatpush2.msra.mxu0 0.0
    %526 = vmatprep.subr.mxu0 0.0
    %527 = vmatpush2.msra.mxu0 0.0
    %528 = vmatprep.subr.mxu0 0.0
    %529 = vmatpush2.msra.mxu0 0.0
    %530 = vmatprep.subr.mxu0 0.0
    %531 = vmatpush2.msra.mxu0 0.0
    %532 = vmatprep.subr.mxu0 0.0
    %533 = vmatpush2.msra.mxu0 0.0
    %534 = vmatprep.subr.mxu0 0.0
    %535 = vmatpush2.msra.mxu0 0.0
    %536 = vmatprep.subr.mxu0 0.0
    %537 = vmatpush2.msra.mxu0 0.0
    %538 = vmatprep.subr.mxu0 0.0
    %539 = vmatpush2.msra.mxu0 0.0
    %540 = vmatprep.subr.mxu0 0.0
    %541 = vmatpush2.msra.mxu0 0.0
    %542 = vmatprep.subr.mxu0 0.0
    %543 = vmatpush2.msra.mxu0 0.0
    %544 = vmatprep.subr.mxu0 0.0
    %545 = vmatpush2.msra.mxu0 0.0
    %546 = vmatprep.subr.mxu0 0.0
    %547 = vmatpush2.msra.mxu0 0.0
    %548 = vmatprep.subr.mxu0 0.0
    %549 = vmatpush2.msra.mxu0 0.0
    %550 = vmatprep.subr.mxu0 0.0
    %551 = vmatpush2.msra.mxu0 0.0
    %552 = vmatprep.mubr.f32.mxu0 0.0
    %553 = vmatmul.mubr.f32.gmra.mxu0 %v486
    %v554 = vpop.f32.mrf.mxu0
    %v555 = vadd.f32 0.0, %v554
    %v556 = vpop.f32.mrf.mxu0
    %557 = vdwg.mxu0
    %v559 = vsel %vm39, %v118, 0
    %561 = vmatprep.subr.mxu0 0.0
    %562 = vmatpush1.msra.mxu0 0.0
    %563 = vmatprep.subr.mxu0 0.0
    %564 = vmatpush1.msra.mxu0 0.0
    %565 = vmatprep.subr.mxu0 0.0
    %566 = vmatpush1.msra.mxu0 0.0
    %567 = vmatprep.subr.mxu0 0.0
    %568 = vmatpush1.msra.mxu0 0.0
    %569 = vmatprep.subr.mxu0 0.0
    %570 = vmatpush1.msra.mxu0 0.0
    %571 = vmatprep.subr.mxu0 0.0
    %572 = vmatpush1.msra.mxu0 0.0
    %573 = vmatprep.subr.mxu0 0.0
    %574 = vmatpush1.msra.mxu0 0.0
    %575 = vmatprep.subr.mxu0 0.0
    %576 = vmatpush1.msra.mxu0 0.0
    %577 = vmatprep.subr.mxu0 0.0
    %578 = vmatpush1.msra.mxu0 0.0
    %579 = vmatprep.subr.mxu0 0.0
    %580 = vmatpush1.msra.mxu0 0.0
    %581 = vmatprep.subr.mxu0 0.0
    %582 = vmatpush1.msra.mxu0 0.0
    %583 = vmatprep.subr.mxu0 0.0
    %584 = vmatpush1.msra.mxu0 0.0
    %585 = vmatprep.subr.mxu0 0.0
    %586 = vmatpush1.msra.mxu0 0.0
    %587 = vmatprep.subr.mxu0 0.0
    %588 = vmatpush1.msra.mxu0 0.0
    %589 = vmatprep.subr.mxu0 0.0
    %590 = vmatpush1.msra.mxu0 %v36
    %591 = vmatprep.subr.mxu0 0.0
    %592 = vmatpush1.msra.mxu0 %v35
    %593 = vmatprep.subr.mxu0 0.0
    %594 = vmatpush2.msra.mxu0 0.0
    %595 = vmatprep.subr.mxu0 0.0
    %596 = vmatpush2.msra.mxu0 0.0
    %597 = vmatprep.subr.mxu0 0.0
    %598 = vmatpush2.msra.mxu0 0.0
    %599 = vmatprep.subr.mxu0 0.0
    %600 = vmatpush2.msra.mxu0 0.0
    %601 = vmatprep.subr.mxu0 0.0
    %602 = vmatpush2.msra.mxu0 0.0
    %603 = vmatprep.subr.mxu0 0.0
    %604 = vmatpush2.msra.mxu0 0.0
    %605 = vmatprep.subr.mxu0 0.0
    %606 = vmatpush2.msra.mxu0 0.0
    %607 = vmatprep.subr.mxu0 0.0
    %608 = vmatpush2.msra.mxu0 0.0
    %609 = vmatprep.subr.mxu0 0.0
    %610 = vmatpush2.msra.mxu0 0.0
    %611 = vmatprep.subr.mxu0 0.0
    %612 = vmatpush2.msra.mxu0 0.0
    %613 = vmatprep.subr.mxu0 0.0
    %614 = vmatpush2.msra.mxu0 0.0
    %615 = vmatprep.subr.mxu0 0.0
    %616 = vmatpush2.msra.mxu0 0.0
    %617 = vmatprep.subr.mxu0 0.0
    %618 = vmatpush2.msra.mxu0 0.0
    %619 = vmatprep.subr.mxu0 0.0
    %620 = vmatpush2.msra.mxu0 0.0
    %621 = vmatprep.subr.mxu0 0.0
    %622 = vmatpush2.msra.mxu0 0.0
    %623 = vmatprep.subr.mxu0 0.0
    %624 = vmatpush2.msra.mxu0 0.0
    %625 = vmatprep.mubr.f32.mxu0 0.0
    %626 = vmatmul.mubr.f32.gmra.mxu0 %v559
    %v627 = vpop.f32.mrf.mxu0
    %v628 = vadd.f32 0.0, %v627
    %v629 = vpop.f32.mrf.mxu0
    %630 = vdwg.mxu0
    %v632 = vsel %vm39, %v119, 0
    %634 = vmatprep.subr.mxu0 0.0
    %635 = vmatpush1.msra.mxu0 0.0
    %636 = vmatprep.subr.mxu0 0.0
    %637 = vmatpush1.msra.mxu0 0.0
    %638 = vmatprep.subr.mxu0 0.0
    %639 = vmatpush1.msra.mxu0 0.0
    %640 = vmatprep.subr.mxu0 0.0
    %641 = vmatpush1.msra.mxu0 0.0
    %642 = vmatprep.subr.mxu0 0.0
    %643 = vmatpush1.msra.mxu0 0.0
    %644 = vmatprep.subr.mxu0 0.0
    %645 = vmatpush1.msra.mxu0 0.0
    %646 = vmatprep.subr.mxu0 0.0
    %647 = vmatpush1.msra.mxu0 0.0
    %648 = vmatprep.subr.mxu0 0.0
    %649 = vmatpush1.msra.mxu0 0.0
    %650 = vmatprep.subr.mxu0 0.0
    %651 = vmatpush1.msra.mxu0 0.0
    %652 = vmatprep.subr.mxu0 0.0
    %653 = vmatpush1.msra.mxu0 0.0
    %654 = vmatprep.subr.mxu0 0.0
    %655 = vmatpush1.msra.mxu0 0.0
    %656 = vmatprep.subr.mxu0 0.0
    %657 = vmatpush1.msra.mxu0 0.0
    %658 = vmatprep.subr.mxu0 0.0
    %659 = vmatpush1.msra.mxu0 0.0
    %660 = vmatprep.subr.mxu0 0.0
    %661 = vmatpush1.msra.mxu0 0.0
    %662 = vmatprep.subr.mxu0 0.0
    %663 = vmatpush1.msra.mxu0 %v38
    %664 = vmatprep.subr.mxu0 0.0
    %665 = vmatpush1.msra.mxu0 %v37
    %666 = vmatprep.subr.mxu0 0.0
    %667 = vmatpush2.msra.mxu0 0.0
    %668 = vmatprep.subr.mxu0 0.0
    %669 = vmatpush2.msra.mxu0 0.0
    %670 = vmatprep.subr.mxu0 0.0
    %671 = vmatpush2.msra.mxu0 0.0
    %672 = vmatprep.subr.mxu0 0.0
    %673 = vmatpush2.msra.mxu0 0.0
    %674 = vmatprep.subr.mxu0 0.0
    %675 = vmatpush2.msra.mxu0 0.0
    %676 = vmatprep.subr.mxu0 0.0
    %677 = vmatpush2.msra.mxu0 0.0
    %678 = vmatprep.subr.mxu0 0.0
    %679 = vmatpush2.msra.mxu0 0.0
    %680 = vmatprep.subr.mxu0 0.0
    %681 = vmatpush2.msra.mxu0 0.0
    %682 = vmatprep.subr.mxu0 0.0
    %683 = vmatpush2.msra.mxu0 0.0
    %684 = vmatprep.subr.mxu0 0.0
    %685 = vmatpush2.msra.mxu0 0.0
    %686 = vmatprep.subr.mxu0 0.0
    %687 = vmatpush2.msra.mxu0 0.0
    %688 = vmatprep.subr.mxu0 0.0
    %689 = vmatpush2.msra.mxu0 0.0
    %690 = vmatprep.subr.mxu0 0.0
    %691 = vmatpush2.msra.mxu0 0.0
    %692 = vmatprep.subr.mxu0 0.0
    %693 = vmatpush2.msra.mxu0 0.0
    %694 = vmatprep.subr.mxu0 0.0
    %695 = vmatpush2.msra.mxu0 0.0
    %696 = vmatprep.subr.mxu0 0.0
    %697 = vmatpush2.msra.mxu0 0.0
    %698 = vmatprep.mubr.f32.mxu0 0.0
    %699 = vmatmul.mubr.f32.gmra.mxu0 %v632
    %v700 = vpop.f32.mrf.mxu0
    %v701 = vadd.f32 0.0, %v700
    %v702 = vpop.f32.mrf.mxu0
    %703 = vdwg.mxu0
    %v705 = vsel %vm39, %v190, 0
    %707 = vmatprep.subr.mxu0 0.0
    %708 = vmatpush1.msra.mxu0 0.0
    %709 = vmatprep.subr.mxu0 0.0
    %710 = vmatpush1.msra.mxu0 0.0
    %711 = vmatprep.subr.mxu0 0.0
    %712 = vmatpush1.msra.mxu0 0.0
    %713 = vmatprep.subr.mxu0 0.0
    %714 = vmatpush1.msra.mxu0 0.0
    %715 = vmatprep.subr.mxu0 0.0
    %716 = vmatpush1.msra.mxu0 0.0
    %717 = vmatprep.subr.mxu0 0.0
    %718 = vmatpush1.msra.mxu0 0.0
    %719 = vmatprep.subr.mxu0 0.0
    %720 = vmatpush1.msra.mxu0 0.0
    %721 = vmatprep.subr.mxu0 0.0
    %722 = vmatpush1.msra.mxu0 0.0
    %723 = vmatprep.subr.mxu0 0.0
    %724 = vmatpush1.msra.mxu0 0.0
    %725 = vmatprep.subr.mxu0 0.0
    %726 = vmatpush1.msra.mxu0 0.0
    %727 = vmatprep.subr.mxu0 0.0
    %728 = vmatpush1.msra.mxu0 0.0
    %729 = vmatprep.subr.mxu0 0.0
    %730 = vmatpush1.msra.mxu0 0.0
    %731 = vmatprep.subr.mxu0 0.0
    %732 = vmatpush1.msra.mxu0 0.0
    %733 = vmatprep.subr.mxu0 0.0
    %734 = vmatpush1.msra.mxu0 0.0
    %735 = vmatprep.subr.mxu0 0.0
    %736 = vmatpush1.msra.mxu0 %v24
    %737 = vmatprep.subr.mxu0 0.0
    %738 = vmatpush1.msra.mxu0 %v23
    %739 = vmatprep.subr.mxu0 0.0
    %740 = vmatpush2.msra.mxu0 0.0
    %741 = vmatprep.subr.mxu0 0.0
    %742 = vmatpush2.msra.mxu0 0.0
    %743 = vmatprep.subr.mxu0 0.0
    %744 = vmatpush2.msra.mxu0 0.0
    %745 = vmatprep.subr.mxu0 0.0
    %746 = vmatpush2.msra.mxu0 0.0
    %747 = vmatprep.subr.mxu0 0.0
    %748 = vmatpush2.msra.mxu0 0.0
    %749 = vmatprep.subr.mxu0 0.0
    %750 = vmatpush2.msra.mxu0 0.0
    %751 = vmatprep.subr.mxu0 0.0
    %752 = vmatpush2.msra.mxu0 0.0
    %753 = vmatprep.subr.mxu0 0.0
    %754 = vmatpush2.msra.mxu0 0.0
    %755 = vmatprep.subr.mxu0 0.0
    %756 = vmatpush2.msra.mxu0 0.0
    %757 = vmatprep.subr.mxu0 0.0
    %758 = vmatpush2.msra.mxu0 0.0
    %759 = vmatprep.subr.mxu0 0.0
    %760 = vmatpush2.msra.mxu0 0.0
    %761 = vmatprep.subr.mxu0 0.0
    %762 = vmatpush2.msra.mxu0 0.0
    %763 = vmatprep.subr.mxu0 0.0
    %764 = vmatpush2.msra.mxu0 0.0
    %765 = vmatprep.subr.mxu0 0.0
    %766 = vmatpush2.msra.mxu0 0.0
    %767 = vmatprep.subr.mxu0 0.0
    %768 = vmatpush2.msra.mxu0 0.0
    %769 = vmatprep.subr.mxu0 0.0
    %770 = vmatpush2.msra.mxu0 0.0
    %771 = vmatprep.mubr.f32.mxu0 0.0
    %772 = vmatmul.mubr.f32.gmra.mxu0 %v705
    %v773 = vpop.f32.mrf.mxu0
    %v774 = vadd.f32 0.0, %v773
    %v775 = vpop.f32.mrf.mxu0
    %776 = vdwg.mxu0
    %v778 = vsel %vm39, %v263, 0
    %780 = vmatprep.subr.mxu0 0.0
    %781 = vmatpush1.msra.mxu0 0.0
    %782 = vmatprep.subr.mxu0 0.0
    %783 = vmatpush1.msra.mxu0 0.0
    %784 = vmatprep.subr.mxu0 0.0
    %785 = vmatpush1.msra.mxu0 0.0
    %786 = vmatprep.subr.mxu0 0.0
    %787 = vmatpush1.msra.mxu0 0.0
    %788 = vmatprep.subr.mxu0 0.0
    %789 = vmatpush1.msra.mxu0 0.0
    %790 = vmatprep.subr.mxu0 0.0
    %791 = vmatpush1.msra.mxu0 0.0
    %792 = vmatprep.subr.mxu0 0.0
    %793 = vmatpush1.msra.mxu0 0.0
    %794 = vmatprep.subr.mxu0 0.0
    %795 = vmatpush1.msra.mxu0 0.0
    %796 = vmatprep.subr.mxu0 0.0
    %797 = vmatpush1.msra.mxu0 0.0
    %798 = vmatprep.subr.mxu0 0.0
    %799 = vmatpush1.msra.mxu0 0.0
    %800 = vmatprep.subr.mxu0 0.0
    %801 = vmatpush1.msra.mxu0 0.0
    %802 = vmatprep.subr.mxu0 0.0
    %803 = vmatpush1.msra.mxu0 0.0
    %804 = vmatprep.subr.mxu0 0.0
    %805 = vmatpush1.msra.mxu0 0.0
    %806 = vmatprep.subr.mxu0 0.0
    %807 = vmatpush1.msra.mxu0 0.0
    %808 = vmatprep.subr.mxu0 0.0
    %809 = vmatpush1.msra.mxu0 %v26
    %810 = vmatprep.subr.mxu0 0.0
    %811 = vmatpush1.msra.mxu0 %v25
    %812 = vmatprep.subr.mxu0 0.0
    %813 = vmatpush2.msra.mxu0 0.0
    %814 = vmatprep.subr.mxu0 0.0
    %815 = vmatpush2.msra.mxu0 0.0
    %816 = vmatprep.subr.mxu0 0.0
    %817 = vmatpush2.msra.mxu0 0.0
    %818 = vmatprep.subr.mxu0 0.0
    %819 = vmatpush2.msra.mxu0 0.0
    %820 = vmatprep.subr.mxu0 0.0
    %821 = vmatpush2.msra.mxu0 0.0
    %822 = vmatprep.subr.mxu0 0.0
    %823 = vmatpush2.msra.mxu0 0.0
    %824 = vmatprep.subr.mxu0 0.0
    %825 = vmatpush2.msra.mxu0 0.0
    %826 = vmatprep.subr.mxu0 0.0
    %827 = vmatpush2.msra.mxu0 0.0
    %828 = vmatprep.subr.mxu0 0.0
    %829 = vmatpush2.msra.mxu0 0.0
    %830 = vmatprep.subr.mxu0 0.0
    %831 = vmatpush2.msra.mxu0 0.0
    %832 = vmatprep.subr.mxu0 0.0
    %833 = vmatpush2.msra.mxu0 0.0
    %834 = vmatprep.subr.mxu0 0.0
    %835 = vmatpush2.msra.mxu0 0.0
    %836 = vmatprep.subr.mxu0 0.0
    %837 = vmatpush2.msra.mxu0 0.0
    %838 = vmatprep.subr.mxu0 0.0
    %839 = vmatpush2.msra.mxu0 0.0
    %840 = vmatprep.subr.mxu0 0.0
    %841 = vmatpush2.msra.mxu0 0.0
    %842 = vmatprep.subr.mxu0 0.0
    %843 = vmatpush2.msra.mxu0 0.0
    %844 = vmatprep.mubr.f32.mxu0 0.0
    %845 = vmatmul.mubr.f32.gmra.mxu0 %v778
    %v846 = vpop.f32.mrf.mxu0
    %v847 = vadd.f32 0.0, %v846
    %v848 = vpop.f32.mrf.mxu0
    %849 = vdwg.mxu0
    %v851 = vsel %vm39, %v336, 0
    %853 = vmatprep.subr.mxu0 0.0
    %854 = vmatpush1.msra.mxu0 0.0
    %855 = vmatprep.subr.mxu0 0.0
    %856 = vmatpush1.msra.mxu0 0.0
    %857 = vmatprep.subr.mxu0 0.0
    %858 = vmatpush1.msra.mxu0 0.0
    %859 = vmatprep.subr.mxu0 0.0
    %860 = vmatpush1.msra.mxu0 0.0
    %861 = vmatprep.subr.mxu0 0.0
    %862 = vmatpush1.msra.mxu0 0.0
    %863 = vmatprep.subr.mxu0 0.0
    %864 = vmatpush1.msra.mxu0 0.0
    %865 = vmatprep.subr.mxu0 0.0
    %866 = vmatpush1.msra.mxu0 0.0
    %867 = vmatprep.subr.mxu0 0.0
    %868 = vmatpush1.msra.mxu0 0.0
    %869 = vmatprep.subr.mxu0 0.0
    %870 = vmatpush1.msra.mxu0 0.0
    %871 = vmatprep.subr.mxu0 0.0
    %872 = vmatpush1.msra.mxu0 0.0
    %873 = vmatprep.subr.mxu0 0.0
    %874 = vmatpush1.msra.mxu0 0.0
    %875 = vmatprep.subr.mxu0 0.0
    %876 = vmatpush1.msra.mxu0 0.0
    %877 = vmatprep.subr.mxu0 0.0
    %878 = vmatpush1.msra.mxu0 0.0
    %879 = vmatprep.subr.mxu0 0.0
    %880 = vmatpush1.msra.mxu0 0.0
    %881 = vmatprep.subr.mxu0 0.0
    %882 = vmatpush1.msra.mxu0 %v28
    %883 = vmatprep.subr.mxu0 0.0
    %884 = vmatpush1.msra.mxu0 %v27
    %885 = vmatprep.subr.mxu0 0.0
    %886 = vmatpush2.msra.mxu0 0.0
    %887 = vmatprep.subr.mxu0 0.0
    %888 = vmatpush2.msra.mxu0 0.0
    %889 = vmatprep.subr.mxu0 0.0
    %890 = vmatpush2.msra.mxu0 0.0
    %891 = vmatprep.subr.mxu0 0.0
    %892 = vmatpush2.msra.mxu0 0.0
    %893 = vmatprep.subr.mxu0 0.0
    %894 = vmatpush2.msra.mxu0 0.0
    %895 = vmatprep.subr.mxu0 0.0
    %896 = vmatpush2.msra.mxu0 0.0
    %897 = vmatprep.subr.mxu0 0.0
    %898 = vmatpush2.msra.mxu0 0.0
    %899 = vmatprep.subr.mxu0 0.0
    %900 = vmatpush2.msra.mxu0 0.0
    %901 = vmatprep.subr.mxu0 0.0
    %902 = vmatpush2.msra.mxu0 0.0
    %903 = vmatprep.subr.mxu0 0.0
    %904 = vmatpush2.msra.mxu0 0.0
    %905 = vmatprep.subr.mxu0 0.0
    %906 = vmatpush2.msra.mxu0 0.0
    %907 = vmatprep.subr.mxu0 0.0
    %908 = vmatpush2.msra.mxu0 0.0
    %909 = vmatprep.subr.mxu0 0.0
    %910 = vmatpush2.msra.mxu0 0.0
    %911 = vmatprep.subr.mxu0 0.0
    %912 = vmatpush2.msra.mxu0 0.0
    %913 = vmatprep.subr.mxu0 0.0
    %914 = vmatpush2.msra.mxu0 0.0
    %915 = vmatprep.subr.mxu0 0.0
    %916 = vmatpush2.msra.mxu0 0.0
    %917 = vmatprep.mubr.f32.mxu0 0.0
    %918 = vmatmul.mubr.f32.gmra.mxu0 %v851
    %v919 = vpop.f32.mrf.mxu0
    %v920 = vadd.f32 0.0, %v919
    %v921 = vpop.f32.mrf.mxu0
    %922 = vdwg.mxu0
    %v924 = vsel %vm39, %v409, 0
    %926 = vmatprep.subr.mxu0 0.0
    %927 = vmatpush1.msra.mxu0 0.0
    %928 = vmatprep.subr.mxu0 0.0
    %929 = vmatpush1.msra.mxu0 0.0
    %930 = vmatprep.subr.mxu0 0.0
    %931 = vmatpush1.msra.mxu0 0.0
    %932 = vmatprep.subr.mxu0 0.0
    %933 = vmatpush1.msra.mxu0 0.0
    %934 = vmatprep.subr.mxu0 0.0
    %935 = vmatpush1.msra.mxu0 0.0
    %936 = vmatprep.subr.mxu0 0.0
    %937 = vmatpush1.msra.mxu0 0.0
    %938 = vmatprep.subr.mxu0 0.0
    %939 = vmatpush1.msra.mxu0 0.0
    %940 = vmatprep.subr.mxu0 0.0
    %941 = vmatpush1.msra.mxu0 0.0
    %942 = vmatprep.subr.mxu0 0.0
    %943 = vmatpush1.msra.mxu0 0.0
    %944 = vmatprep.subr.mxu0 0.0
    %945 = vmatpush1.msra.mxu0 0.0
    %946 = vmatprep.subr.mxu0 0.0
    %947 = vmatpush1.msra.mxu0 0.0
    %948 = vmatprep.subr.mxu0 0.0
    %949 = vmatpush1.msra.mxu0 0.0
    %950 = vmatprep.subr.mxu0 0.0
    %951 = vmatpush1.msra.mxu0 0.0
    %952 = vmatprep.subr.mxu0 0.0
    %953 = vmatpush1.msra.mxu0 0.0
    %954 = vmatprep.subr.mxu0 0.0
    %955 = vmatpush1.msra.mxu0 %v30
    %956 = vmatprep.subr.mxu0 0.0
    %957 = vmatpush1.msra.mxu0 %v29
    %958 = vmatprep.subr.mxu0 0.0
    %959 = vmatpush2.msra.mxu0 0.0
    %960 = vmatprep.subr.mxu0 0.0
    %961 = vmatpush2.msra.mxu0 0.0
    %962 = vmatprep.subr.mxu0 0.0
    %963 = vmatpush2.msra.mxu0 0.0
    %964 = vmatprep.subr.mxu0 0.0
    %965 = vmatpush2.msra.mxu0 0.0
    %966 = vmatprep.subr.mxu0 0.0
    %967 = vmatpush2.msra.mxu0 0.0
    %968 = vmatprep.subr.mxu0 0.0
    %969 = vmatpush2.msra.mxu0 0.0
    %970 = vmatprep.subr.mxu0 0.0
    %971 = vmatpush2.msra.mxu0 0.0
    %972 = vmatprep.subr.mxu0 0.0
    %973 = vmatpush2.msra.mxu0 0.0
    %974 = vmatprep.subr.mxu0 0.0
    %975 = vmatpush2.msra.mxu0 0.0
    %976 = vmatprep.subr.mxu0 0.0
    %977 = vmatpush2.msra.mxu0 0.0
    %978 = vmatprep.subr.mxu0 0.0
    %979 = vmatpush2.msra.mxu0 0.0
    %980 = vmatprep.subr.mxu0 0.0
    %981 = vmatpush2.msra.mxu0 0.0
    %982 = vmatprep.subr.mxu0 0.0
    %983 = vmatpush2.msra.mxu0 0.0
    %984 = vmatprep.subr.mxu0 0.0
    %985 = vmatpush2.msra.mxu0 0.0
    %986 = vmatprep.subr.mxu0 0.0
    %987 = vmatpush2.msra.mxu0 0.0
    %988 = vmatprep.subr.mxu0 0.0
    %989 = vmatpush2.msra.mxu0 0.0
    %990 = vmatprep.mubr.f32.mxu0 0.0
    %991 = vmatmul.mubr.f32.gmra.mxu0 %v924
    %v992 = vpop.f32.mrf.mxu0
    %v993 = vadd.f32 0.0, %v992
    %v994 = vpop.f32.mrf.mxu0
    %995 = vdwg.mxu0
    %v997 = vsel %vm39, %v482, 0
    %999 = vmatprep.subr.mxu0 0.0
    %1000 = vmatpush1.msra.mxu0 0.0
    %1001 = vmatprep.subr.mxu0 0.0
    %1002 = vmatpush1.msra.mxu0 0.0
    %1003 = vmatprep.subr.mxu0 0.0
    %1004 = vmatpush1.msra.mxu0 0.0
    %1005 = vmatprep.subr.mxu0 0.0
    %1006 = vmatpush1.msra.mxu0 0.0
    %1007 = vmatprep.subr.mxu0 0.0
    %1008 = vmatpush1.msra.mxu0 0.0
    %1009 = vmatprep.subr.mxu0 0.0
    %1010 = vmatpush1.msra.mxu0 0.0
    %1011 = vmatprep.subr.mxu0 0.0
    %1012 = vmatpush1.msra.mxu0 0.0
    %1013 = vmatprep.subr.mxu0 0.0
    %1014 = vmatpush1.msra.mxu0 0.0
    %1015 = vmatprep.subr.mxu0 0.0
    %1016 = vmatpush1.msra.mxu0 0.0
    %1017 = vmatprep.subr.mxu0 0.0
    %1018 = vmatpush1.msra.mxu0 0.0
    %1019 = vmatprep.subr.mxu0 0.0
    %1020 = vmatpush1.msra.mxu0 0.0
    %1021 = vmatprep.subr.mxu0 0.0
    %1022 = vmatpush1.msra.mxu0 0.0
    %1023 = vmatprep.subr.mxu0 0.0
    %1024 = vmatpush1.msra.mxu0 0.0
    %1025 = vmatprep.subr.mxu0 0.0
    %1026 = vmatpush1.msra.mxu0 0.0
    %1027 = vmatprep.subr.mxu0 0.0
    %1028 = vmatpush1.msra.mxu0 %v32
    %1029 = vmatprep.subr.mxu0 0.0
    %1030 = vmatpush1.msra.mxu0 %v31
    %1031 = vmatprep.subr.mxu0 0.0
    %1032 = vmatpush2.msra.mxu0 0.0
    %1033 = vmatprep.subr.mxu0 0.0
    %1034 = vmatpush2.msra.mxu0 0.0
    %1035 = vmatprep.subr.mxu0 0.0
    %1036 = vmatpush2.msra.mxu0 0.0
    %1037 = vmatprep.subr.mxu0 0.0
    %1038 = vmatpush2.msra.mxu0 0.0
    %1039 = vmatprep.subr.mxu0 0.0
    %1040 = vmatpush2.msra.mxu0 0.0
    %1041 = vmatprep.subr.mxu0 0.0
    %1042 = vmatpush2.msra.mxu0 0.0
    %1043 = vmatprep.subr.mxu0 0.0
    %1044 = vmatpush2.msra.mxu0 0.0
    %1045 = vmatprep.subr.mxu0 0.0
    %1046 = vmatpush2.msra.mxu0 0.0
    %1047 = vmatprep.subr.mxu0 0.0
    %1048 = vmatpush2.msra.mxu0 0.0
    %1049 = vmatprep.subr.mxu0 0.0
    %1050 = vmatpush2.msra.mxu0 0.0
    %1051 = vmatprep.subr.mxu0 0.0
    %1052 = vmatpush2.msra.mxu0 0.0
    %1053 = vmatprep.subr.mxu0 0.0
    %1054 = vmatpush2.msra.mxu0 0.0
    %1055 = vmatprep.subr.mxu0 0.0
    %1056 = vmatpush2.msra.mxu0 0.0
    %1057 = vmatprep.subr.mxu0 0.0
    %1058 = vmatpush2.msra.mxu0 0.0
    %1059 = vmatprep.subr.mxu0 0.0
    %1060 = vmatpush2.msra.mxu0 0.0
    %1061 = vmatprep.subr.mxu0 0.0
    %1062 = vmatpush2.msra.mxu0 0.0
    %1063 = vmatprep.mubr.f32.mxu0 0.0
    %1064 = vmatmul.mubr.f32.gmra.mxu0 %v997
    %v1065 = vpop.f32.mrf.mxu0
    %v1066 = vadd.f32 0.0, %v1065
    %v1067 = vpop.f32.mrf.mxu0
    %1068 = vdwg.mxu0
    %v1070 = vsel %vm39, %v555, 0
    %1072 = vmatprep.subr.mxu0 0.0
    %1073 = vmatpush1.msra.mxu0 0.0
    %1074 = vmatprep.subr.mxu0 0.0
    %1075 = vmatpush1.msra.mxu0 0.0
    %1076 = vmatprep.subr.mxu0 0.0
    %1077 = vmatpush1.msra.mxu0 0.0
    %1078 = vmatprep.subr.mxu0 0.0
    %1079 = vmatpush1.msra.mxu0 0.0
    %1080 = vmatprep.subr.mxu0 0.0
    %1081 = vmatpush1.msra.mxu0 0.0
    %1082 = vmatprep.subr.mxu0 0.0
    %1083 = vmatpush1.msra.mxu0 0.0
    %1084 = vmatprep.subr.mxu0 0.0
    %1085 = vmatpush1.msra.mxu0 0.0
    %1086 = vmatprep.subr.mxu0 0.0
    %1087 = vmatpush1.msra.mxu0 0.0
    %1088 = vmatprep.subr.mxu0 0.0
    %1089 = vmatpush1.msra.mxu0 0.0
    %1090 = vmatprep.subr.mxu0 0.0
    %1091 = vmatpush1.msra.mxu0 0.0
    %1092 = vmatprep.subr.mxu0 0.0
    %1093 = vmatpush1.msra.mxu0 0.0
    %1094 = vmatprep.subr.mxu0 0.0
    %1095 = vmatpush1.msra.mxu0 0.0
    %1096 = vmatprep.subr.mxu0 0.0
    %1097 = vmatpush1.msra.mxu0 0.0
    %1098 = vmatprep.subr.mxu0 0.0
    %1099 = vmatpush1.msra.mxu0 0.0
    %1100 = vmatprep.subr.mxu0 0.0
    %1101 = vmatpush1.msra.mxu0 %v34
    %1102 = vmatprep.subr.mxu0 0.0
    %1103 = vmatpush1.msra.mxu0 %v33
    %1104 = vmatprep.subr.mxu0 0.0
    %1105 = vmatpush2.msra.mxu0 0.0
    %1106 = vmatprep.subr.mxu0 0.0
    %1107 = vmatpush2.msra.mxu0 0.0
    %1108 = vmatprep.subr.mxu0 0.0
    %1109 = vmatpush2.msra.mxu0 0.0
    %1110 = vmatprep.subr.mxu0 0.0
    %1111 = vmatpush2.msra.mxu0 0.0
    %1112 = vmatprep.subr.mxu0 0.0
    %1113 = vmatpush2.msra.mxu0 0.0
    %1114 = vmatprep.subr.mxu0 0.0
    %1115 = vmatpush2.msra.mxu0 0.0
    %1116 = vmatprep.subr.mxu0 0.0
    %1117 = vmatpush2.msra.mxu0 0.0
    %1118 = vmatprep.subr.mxu0 0.0
    %1119 = vmatpush2.msra.mxu0 0.0
    %1120 = vmatprep.subr.mxu0 0.0
    %1121 = vmatpush2.msra.mxu0 0.0
    %1122 = vmatprep.subr.mxu0 0.0
    %1123 = vmatpush2.msra.mxu0 0.0
    %1124 = vmatprep.subr.mxu0 0.0
    %1125 = vmatpush2.msra.mxu0 0.0
    %1126 = vmatprep.subr.mxu0 0.0
    %1127 = vmatpush2.msra.mxu0 0.0
    %1128 = vmatprep.subr.mxu0 0.0
    %1129 = vmatpush2.msra.mxu0 0.0
    %1130 = vmatprep.subr.mxu0 0.0
    %1131 = vmatpush2.msra.mxu0 0.0
    %1132 = vmatprep.subr.mxu0 0.0
    %1133 = vmatpush2.msra.mxu0 0.0
    %1134 = vmatprep.subr.mxu0 0.0
    %1135 = vmatpush2.msra.mxu0 0.0
    %1136 = vmatprep.mubr.f32.mxu0 0.0
    %1137 = vmatmul.mubr.f32.gmra.mxu0 %v1070
    %v1138 = vpop.f32.mrf.mxu0
    %v1139 = vadd.f32 0.0, %v1138
    %v1140 = vpop.f32.mrf.mxu0
    %1141 = vdwg.mxu0
    %v1143 = vsel %vm39, %v628, 0
    %1145 = vmatprep.subr.mxu0 0.0
    %1146 = vmatpush1.msra.mxu0 0.0
    %1147 = vmatprep.subr.mxu0 0.0
    %1148 = vmatpush1.msra.mxu0 0.0
    %1149 = vmatprep.subr.mxu0 0.0
    %1150 = vmatpush1.msra.mxu0 0.0
    %1151 = vmatprep.subr.mxu0 0.0
    %1152 = vmatpush1.msra.mxu0 0.0
    %1153 = vmatprep.subr.mxu0 0.0
    %1154 = vmatpush1.msra.mxu0 0.0
    %1155 = vmatprep.subr.mxu0 0.0
    %1156 = vmatpush1.msra.mxu0 0.0
    %1157 = vmatprep.subr.mxu0 0.0
    %1158 = vmatpush1.msra.mxu0 0.0
    %1159 = vmatprep.subr.mxu0 0.0
    %1160 = vmatpush1.msra.mxu0 0.0
    %1161 = vmatprep.subr.mxu0 0.0
    %1162 = vmatpush1.msra.mxu0 0.0
    %1163 = vmatprep.subr.mxu0 0.0
    %1164 = vmatpush1.msra.mxu0 0.0
    %1165 = vmatprep.subr.mxu0 0.0
    %1166 = vmatpush1.msra.mxu0 0.0
    %1167 = vmatprep.subr.mxu0 0.0
    %1168 = vmatpush1.msra.mxu0 0.0
    %1169 = vmatprep.subr.mxu0 0.0
    %1170 = vmatpush1.msra.mxu0 0.0
    %1171 = vmatprep.subr.mxu0 0.0
    %1172 = vmatpush1.msra.mxu0 0.0
    %1173 = vmatprep.subr.mxu0 0.0
    %1174 = vmatpush1.msra.mxu0 %v36
    %1175 = vmatprep.subr.mxu0 0.0
    %1176 = vmatpush1.msra.mxu0 %v35
    %1177 = vmatprep.subr.mxu0 0.0
    %1178 = vmatpush2.msra.mxu0 0.0
    %1179 = vmatprep.subr.mxu0 0.0
    %1180 = vmatpush2.msra.mxu0 0.0
    %1181 = vmatprep.subr.mxu0 0.0
    %1182 = vmatpush2.msra.mxu0 0.0
    %1183 = vmatprep.subr.mxu0 0.0
    %1184 = vmatpush2.msra.mxu0 0.0
    %1185 = vmatprep.subr.mxu0 0.0
    %1186 = vmatpush2.msra.mxu0 0.0
    %1187 = vmatprep.subr.mxu0 0.0
    %1188 = vmatpush2.msra.mxu0 0.0
    %1189 = vmatprep.subr.mxu0 0.0
    %1190 = vmatpush2.msra.mxu0 0.0
    %1191 = vmatprep.subr.mxu0 0.0
    %1192 = vmatpush2.msra.mxu0 0.0
    %1193 = vmatprep.subr.mxu0 0.0
    %1194 = vmatpush2.msra.mxu0 0.0
    %1195 = vmatprep.subr.mxu0 0.0
    %1196 = vmatpush2.msra.mxu0 0.0
    %1197 = vmatprep.subr.mxu0 0.0
    %1198 = vmatpush2.msra.mxu0 0.0
    %1199 = vmatprep.subr.mxu0 0.0
    %1200 = vmatpush2.msra.mxu0 0.0
    %1201 = vmatprep.subr.mxu0 0.0
    %1202 = vmatpush2.msra.mxu0 0.0
    %1203 = vmatprep.subr.mxu0 0.0
    %1204 = vmatpush2.msra.mxu0 0.0
    %1205 = vmatprep.subr.mxu0 0.0
    %1206 = vmatpush2.msra.mxu0 0.0
    %1207 = vmatprep.subr.mxu0 0.0
    %1208 = vmatpush2.msra.mxu0 0.0
    %1209 = vmatprep.mubr.f32.mxu0 0.0
    %1210 = vmatmul.mubr.f32.gmra.mxu0 %v1143
    %v1211 = vpop.f32.mrf.mxu0
    %v1212 = vadd.f32 0.0, %v1211
    %v1213 = vpop.f32.mrf.mxu0
    %1214 = vdwg.mxu0
    %v1216 = vsel %vm39, %v701, 0
    %1218 = vmatprep.subr.mxu0 0.0
    %1219 = vmatpush1.msra.mxu0 0.0
    %1220 = vmatprep.subr.mxu0 0.0
    %1221 = vmatpush1.msra.mxu0 0.0
    %1222 = vmatprep.subr.mxu0 0.0
    %1223 = vmatpush1.msra.mxu0 0.0
    %1224 = vmatprep.subr.mxu0 0.0
    %1225 = vmatpush1.msra.mxu0 0.0
    %1226 = vmatprep.subr.mxu0 0.0
    %1227 = vmatpush1.msra.mxu0 0.0
    %1228 = vmatprep.subr.mxu0 0.0
    %1229 = vmatpush1.msra.mxu0 0.0
    %1230 = vmatprep.subr.mxu0 0.0
    %1231 = vmatpush1.msra.mxu0 0.0
    %1232 = vmatprep.subr.mxu0 0.0
    %1233 = vmatpush1.msra.mxu0 0.0
    %1234 = vmatprep.subr.mxu0 0.0
    %1235 = vmatpush1.msra.mxu0 0.0
    %1236 = vmatprep.subr.mxu0 0.0
    %1237 = vmatpush1.msra.mxu0 0.0
    %1238 = vmatprep.subr.mxu0 0.0
    %1239 = vmatpush1.msra.mxu0 0.0
    %1240 = vmatprep.subr.mxu0 0.0
    %1241 = vmatpush1.msra.mxu0 0.0
    %1242 = vmatprep.subr.mxu0 0.0
    %1243 = vmatpush1.msra.mxu0 0.0
    %1244 = vmatprep.subr.mxu0 0.0
    %1245 = vmatpush1.msra.mxu0 0.0
    %1246 = vmatprep.subr.mxu0 0.0
    %1247 = vmatpush1.msra.mxu0 %v38
    %1248 = vmatprep.subr.mxu0 0.0
    %1249 = vmatpush1.msra.mxu0 %v37
    %1250 = vmatprep.subr.mxu0 0.0
    %1251 = vmatpush2.msra.mxu0 0.0
    %1252 = vmatprep.subr.mxu0 0.0
    %1253 = vmatpush2.msra.mxu0 0.0
    %1254 = vmatprep.subr.mxu0 0.0
    %1255 = vmatpush2.msra.mxu0 0.0
    %1256 = vmatprep.subr.mxu0 0.0
    %1257 = vmatpush2.msra.mxu0 0.0
    %1258 = vmatprep.subr.mxu0 0.0
    %1259 = vmatpush2.msra.mxu0 0.0
    %1260 = vmatprep.subr.mxu0 0.0
    %1261 = vmatpush2.msra.mxu0 0.0
    %1262 = vmatprep.subr.mxu0 0.0
    %1263 = vmatpush2.msra.mxu0 0.0
    %1264 = vmatprep.subr.mxu0 0.0
    %1265 = vmatpush2.msra.mxu0 0.0
    %1266 = vmatprep.subr.mxu0 0.0
    %1267 = vmatpush2.msra.mxu0 0.0
    %1268 = vmatprep.subr.mxu0 0.0
    %1269 = vmatpush2.msra.mxu0 0.0
    %1270 = vmatprep.subr.mxu0 0.0
    %1271 = vmatpush2.msra.mxu0 0.0
    %1272 = vmatprep.subr.mxu0 0.0
    %1273 = vmatpush2.msra.mxu0 0.0
    %1274 = vmatprep.subr.mxu0 0.0
    %1275 = vmatpush2.msra.mxu0 0.0
    %1276 = vmatprep.subr.mxu0 0.0
    %1277 = vmatpush2.msra.mxu0 0.0
    %1278 = vmatprep.subr.mxu0 0.0
    %1279 = vmatpush2.msra.mxu0 0.0
    %1280 = vmatprep.subr.mxu0 0.0
    %1281 = vmatpush2.msra.mxu0 0.0
    %1282 = vmatprep.mubr.f32.mxu0 0.0
    %1283 = vmatmul.mubr.f32.gmra.mxu0 %v1216
    %v1284 = vpop.f32.mrf.mxu0
    %v1285 = vadd.f32 0.0, %v1284
    %v1286 = vpop.f32.mrf.mxu0
    %1287 = vdwg.mxu0
    %v1288 = vmul.f32 %v774, %v774
    %v1289 = vmul.f32 %v847, %v847
    %v1290 = vmul.f32 %v920, %v920
    %v1291 = vmul.f32 %v993, %v993
    %v1292 = vmul.f32 %v1066, %v1066
    %v1293 = vmul.f32 %v1139, %v1139
    %v1294 = vmul.f32 %v1212, %v1212
    %v1295 = vmul.f32 %v1285, %v1285
    %v1304 = vrot.slane %v1289, 7
    %vm1305 = vcmask 1041409
    %v1306 = vsel %vm1305, %v1304, %v1288
    %v1307 = vrot.slane %v1290, 6
    %vm1308 = vcmask 1042434
    %v1309 = vsel %vm1308, %v1307, %v1306
    %v1310 = vrot.slane %v1291, 5
    %vm1311 = vcmask 1043459
    %v1312 = vsel %vm1311, %v1310, %v1309
    %v1313 = vrot.slane %v1292, 4
    %vm1314 = vcmask 1044484
    %v1315 = vsel %vm1314, %v1313, %v1312
    %v1316 = vrot.slane %v1293, 3
    %vm1317 = vcmask 1045509
    %v1318 = vsel %vm1317, %v1316, %v1315
    %v1319 = vrot.slane %v1294, 2
    %vm1320 = vcmask 1046534
    %v1321 = vsel %vm1320, %v1319, %v1318
    %v1322 = vrot.slane %v1295, 1
    %vm1323 = vcmask 1047559
    %v1324 = vsel %vm1323, %v1322, %v1321
    %1326 = vst.msk [vmem:[#allocation5] sm:$0xff] %vm39, %v1324
    // Predicated region
    $region10: #{tpu_custom_call.1} parent=1 // pred_check
      _
    $region11: #{tpu_custom_call.1} parent=1 // pred_check_branch
      %1328 = sbr.rel (0) target = $region13
    $region12: #{tpu_custom_call.1} parent=1 // pred_region
      %s1330 = ssub.s32 128, 128
      %1331 = vsyncadd [#allocation4], %s1330
      %s1333 = sshll.u32 [#allocation5], 4
      %s1334 = int_to_ptr.vmem [resolvable:$true] %s1333
      %1336 = dma.vmem_to_hbm [thread:$0]  %s1334, 128, %s1, [#allocation4]
    $region13: #{tpu_custom_call.1} parent=1 // pred_fallthru
      _
    // Predicated region
    $region14: #{tpu_custom_call.1} parent=1 // pred_check
      _
    $region15: #{tpu_custom_call.1} parent=1 // pred_check_branch
      %1338 = sbr.rel (0) target = $region17
    $region16: #{tpu_custom_call.1} parent=1 // pred_region
      %1339 = dma.done [#allocation4], 128
    $region17: #{tpu_custom_call.1} parent=1 // pred_fallthru
      _
    %1340 = vsyncpa [#allocation3], 1
    %1341 = vsyncpa [#allocation4], 1

</llo_original>
